<compile_context>
chip_gen: v6e
topology: v6e:2x2x1
jax: 0.10.0
libtpu: 0.0.40
codegen_flags: <defaults>
</compile_context>

<pallas_src>
import functools

import jax
import jax.numpy as jnp
from jax.experimental import pallas as pl
from jax.experimental.pallas import tpu as pltpu

_LANE = 128
_SUBLANE = 8


def _mean_dsc_kernel(yt_ref, yp_ref, out_ref,
                     inter_acc, tsum_acc, psum_acc,
                     *, num_classes: int, eps: float):
    """Refs: yt/yp (C, block_rows, 128) with the class axis MAJOR; out (1, 1)."""
    C = num_classes
    n = pl.program_id(0)
    p = pl.program_id(1)
    is_first = jnp.logical_and(n == 0, p == 0)
    is_last = jnp.logical_and(n == pl.num_programs(0) - 1,
                              p == pl.num_programs(1) - 1)

    @pl.when(is_first)
    def _init():
        inter_acc[...] = jnp.zeros_like(inter_acc)
        tsum_acc[...] = jnp.zeros_like(tsum_acc)
        psum_acc[...] = jnp.zeros_like(psum_acc)

    # Per-pixel argmax over the class axis, unrolled over the small static C.
    # Pure elementwise VPU compares/selects (no cross-sublane XLU reductions).
    # Strictly-greater updates reproduce torch.argmax's first-max tie rule.
    # softmax(x) is strictly monotone per pixel, so argmax(softmax(x)) ==
    # argmax(x); the optional softmax of the PyTorch module is skipped.
    def unrolled_argmax(ref):
        best = ref[0].astype(jnp.float32)            # (R, 128)
        arg = jnp.zeros(best.shape, dtype=jnp.int32)
        for c in range(1, C):
            x = ref[c].astype(jnp.float32)
            take = x > best
            best = jnp.where(take, x, best)
            arg = jnp.where(take, jnp.int32(c), arg)
        return arg

    t_arg = unrolled_argmax(yt_ref)                  # (R, 128) int32
    p_arg = unrolled_argmax(yp_ref)
    agree = (t_arg == p_arg)

    R = t_arg.shape[0]

    # (R, 128) -> (8, 128): splitting the sublane axis is layout-preserving,
    # and the sum over the new major axis is pure VPU vreg adds.
    def fold(x):
        return jnp.sum(x.reshape(R // _SUBLANE, _SUBLANE, _LANE), axis=0)

    # Class 0 (background) never contributes to the mean DSC -> skip it.
    for c in range(1, C):
        t_c = (t_arg == c).astype(jnp.float32)
        p_c = (p_arg == c).astype(jnp.float32)
        i_c = jnp.where(agree, t_c, 0.0)             # == t_c * p_c, one mul saved
        tsum_acc[c - 1] += fold(t_c)
        psum_acc[c - 1] += fold(p_c)
        inter_acc[c - 1] += fold(i_c)

    @pl.when(is_last)
    def _finalize():
        total = jnp.float32(0.0)
        for c in range(1, C):
            inter = jnp.sum(inter_acc[c - 1])        # single XLU reduce, once
            union = jnp.sum(tsum_acc[c - 1]) + jnp.sum(psum_acc[c - 1]) - inter
            iou = (inter + eps) / (union + eps)
            total = total + 2.0 * iou / (1.0 + iou)
        mean_val = total / jnp.float32(C - 1)
        out_ref[...] = jnp.broadcast_to(mean_val, out_ref.shape)


def _round_up(x, m):
    return ((x + m - 1) // m) * m


def _pick_block_rows(total_rows, num_classes, itemsize,
                     vmem_budget_bytes=4 * 1024 * 1024):
    """Rows (of 128 pixels) per block, a multiple of 8 sized to the VMEM budget.

    Budget covers 2 inputs x 2 pipeline buffers.  The caller pads the row axis
    up to a multiple of the returned value, so the grid is always exact.
    """
    per_row_bytes = 4 * num_classes * _LANE * itemsize   # 2 inputs x 2 buffers
    max_rows = max(_SUBLANE, (vmem_budget_bytes // per_row_bytes)
                   // _SUBLANE * _SUBLANE)
    return min(_round_up(total_rows, _SUBLANE), max_rows)


def mean_dsc_pallas(y_true, y_pred, num_classes, apply_softmax=False,
                    eps=1e-6, vmem_budget_bytes=4 * 1024 * 1024):
    """y_true, y_pred: (N, C, H, W) float32/bfloat16 arrays (NCHW, like PyTorch)."""
    N, C, H, W = y_true.shape
    assert C == num_classes and C >= 2
    assert y_pred.shape == y_true.shape
    # apply_softmax is intentionally a no-op for the kernel: softmax is strictly
    # monotone per pixel, so the argmax (and hence the DSC) is unchanged.
    del apply_softmax

    HW = H * W
    total_rows = pl.cdiv(HW, _LANE)
    block_rows = _pick_block_rows(total_rows, C, y_true.dtype.itemsize,
                                  vmem_budget_bytes)
    padded_rows = _round_up(total_rows, block_rows)
    padded_hw = padded_rows * _LANE

    yt = y_true.reshape(N, C, HW)        # free, contiguous reshape (no transpose)
    yp = y_pred.reshape(N, C, HW)

    # Zero-pad the pixel axis: padded pixels argmax to class 0 in BOTH tensors
    # (strictly-greater ties), so they only touch the (dropped) background class.
    pad = padded_hw - HW
    if pad:
        pad_blk = jnp.zeros((N, C, pad), dtype=yt.dtype)
        yt = jnp.concatenate([yt, pad_blk], axis=-1)
        yp = jnp.concatenate([yp, pad_blk], axis=-1)

    yt = yt.reshape(N, C, padded_rows, _LANE)   # free split of the last dim
    yp = yp.reshape(N, C, padded_rows, _LANE)

    grid = (N, padded_rows // block_rows)

    kernel = functools.partial(_mean_dsc_kernel, num_classes=C, eps=eps)

    in_spec = pl.BlockSpec((None, C, block_rows, _LANE),
                           lambda n, p: (n, 0, p, 0))
    out = pl.pallas_call(
        kernel,
        out_shape=jax.ShapeDtypeStruct((1, 1), jnp.float32),
        grid_spec=pltpu.PrefetchScalarGridSpec(
            num_scalar_prefetch=0,
            grid=grid,
            in_specs=[in_spec, in_spec],
            out_specs=pl.BlockSpec((1, 1), lambda n, p: (0, 0)),
            scratch_shapes=[
                pltpu.VMEM((C - 1, _SUBLANE, _LANE), jnp.float32),  # intersection
                pltpu.VMEM((C - 1, _SUBLANE, _LANE), jnp.float32),  # y_true counts
                pltpu.VMEM((C - 1, _SUBLANE, _LANE), jnp.float32),  # y_pred counts
            ],
        ),
        compiler_params=pltpu.CompilerParams(
            dimension_semantics=("arbitrary", "arbitrary")),  # single reduction
    )(yt, yp)
    return out[0, 0]


def mean_dsc_ref(y_true, y_pred, num_classes, apply_softmax=False, eps=1e-6):
    """Pure-JAX reference mirroring the PyTorch forward exactly."""
    if apply_softmax:
        y_pred = jax.nn.softmax(y_pred.astype(jnp.float32), axis=1)
    t = jax.nn.one_hot(jnp.argmax(y_true, axis=1), num_classes).reshape(-1, num_classes)
    p = jax.nn.one_hot(jnp.argmax(y_pred, axis=1), num_classes).reshape(-1, num_classes)
    inter = (t * p).sum(0)
    union = t.sum(0) + p.sum(0) - inter
    iou = (inter + eps) / (union + eps)
    dsc = 2.0 * iou / (1.0 + iou)
    return dsc[1:].mean()


if __name__ == "__main__":
    num_classes = 4
    N, C, H, W = 2, num_classes, 16, 16   # P = 512 pixels

    key = jax.random.PRNGKey(0)
    k1, k2 = jax.random.split(key)
    y_true = jax.random.normal(k1, (N, C, H, W), dtype=jnp.float32)
    y_pred = jax.random.normal(k2, (N, C, H, W), dtype=jnp.float32)

    # f32, no softmax
    out = jax.block_until_ready(mean_dsc_pallas(y_true, y_pred, num_classes))
    ref = mean_dsc_ref(y_true, y_pred, num_classes)
    assert jnp.allclose(out, ref, atol=1e-5, rtol=1e-5), (out, ref)

    # softmax path (argmax-invariant; kernel skips the exp entirely)
    out_sm = jax.block_until_ready(
        mean_dsc_pallas(y_true, y_pred, num_classes, apply_softmax=True))
    ref_sm = mean_dsc_ref(y_true, y_pred, num_classes, apply_softmax=True)
    assert jnp.allclose(out_sm, ref_sm, atol=1e-5, rtol=1e-5), (out_sm, ref_sm)

    # bf16 inputs (half the HBM traffic for this bandwidth-bound metric)
    yt_bf = y_true.astype(jnp.bfloat16)
    yp_bf = y_pred.astype(jnp.bfloat16)
    out_bf = jax.block_until_ready(mean_dsc_pallas(yt_bf, yp_bf, num_classes))
    ref_bf = mean_dsc_ref(yt_bf, yp_bf, num_classes)
    assert jnp.allclose(out_bf, ref_bf, atol=1e-5, rtol=1e-5), (out_bf, ref_bf)

    # Non-multiple-of-128 spatial size (exercises the zero-pad path)
    yt_odd = jax.random.normal(k1, (N, C, 13, 9), dtype=jnp.float32)
    yp_odd = jax.random.normal(k2, (N, C, 13, 9), dtype=jnp.float32)
    out_odd = jax.block_until_ready(mean_dsc_pallas(yt_odd, yp_odd, num_classes))
    ref_odd = mean_dsc_ref(yt_odd, yp_odd, num_classes)
    assert jnp.allclose(out_odd, ref_odd, atol=1e-5, rtol=1e-5), (out_odd, ref_odd)

    print("KERNEL_OK")
</pallas_src>

<mosaic_0001>
module attributes {stable_mosaic.version = 11 : i64} {
  func.func @_mean_dsc_kernel(%arg0: i32, %arg1: i32, %arg2: memref<1x4x8x128xf32, #tpu.memory_space<vmem>>, %arg3: memref<1x4x8x128xf32, #tpu.memory_space<vmem>>, %arg4: memref<1x1xf32, #tpu.memory_space<vmem>>, %arg5: memref<3x8x128xf32, #tpu.memory_space<vmem>>, %arg6: memref<3x8x128xf32, #tpu.memory_space<vmem>>, %arg7: memref<3x8x128xf32, #tpu.memory_space<vmem>>) attributes {dimension_semantics = [#tpu.dimension_semantics<arbitrary>, #tpu.dimension_semantics<arbitrary>], iteration_bounds = array<i64: 2, 1>, scalar_prefetch = 0 : i64, scratch_operands = 3 : i64, tpu.core_type = #tpu.core_type<tc>, window_params = [{transform_indices = @transform_0, window_bounds = array<i64: 1, 4, 8, 128>}, {transform_indices = @transform_1, window_bounds = array<i64: 1, 4, 8, 128>}, {pipeline_mode = #tpu.pipeline_mode<synchronous>, transform_indices = @transform_2, window_bounds = array<i64: 1, 1>}]} {
    %c0_i32 = arith.constant 0 : i32
    %0 = arith.cmpi eq, %arg0, %c0_i32 : i32
    %c0_i32_0 = arith.constant 0 : i32
    %1 = arith.cmpi eq, %arg1, %c0_i32_0 : i32
    %2 = arith.andi %0, %1 : i1
    %c1_i32 = arith.constant 1 : i32
    %3 = arith.cmpi eq, %arg0, %c1_i32 : i32
    %c0_i32_1 = arith.constant 0 : i32
    %4 = arith.cmpi eq, %arg1, %c0_i32_1 : i32
    %5 = arith.andi %3, %4 : i1
    %6 = arith.extui %2 : i1 to i32
    %c0_i32_2 = arith.constant 0 : i32
    %7 = arith.cmpi ne, %6, %c0_i32_2 : i32
    scf.if %7 {
      %cst_109 = arith.constant 0.000000e+00 : f32
      %153 = vector.broadcast %cst_109 : f32 to vector<3x8x128xf32>
      %c0_110 = arith.constant 0 : index
      %c0_111 = arith.constant 0 : index
      %c0_112 = arith.constant 0 : index
      %154 = vector.load %arg5[%c0_110, %c0_111, %c0_112] : memref<3x8x128xf32, #tpu.memory_space<vmem>>, vector<3x8x128xf32>
      tpu.vector_store %arg5[%c0_110, %c0_111, %c0_112], %153 {strides = array<i32>} : memref<3x8x128xf32, #tpu.memory_space<vmem>>, vector<3x8x128xf32>,
      %cst_113 = arith.constant 0.000000e+00 : f32
      %155 = vector.broadcast %cst_113 : f32 to vector<3x8x128xf32>
      %c0_114 = arith.constant 0 : index
      %c0_115 = arith.constant 0 : index
      %c0_116 = arith.constant 0 : index
      %156 = vector.load %arg6[%c0_114, %c0_115, %c0_116] : memref<3x8x128xf32, #tpu.memory_space<vmem>>, vector<3x8x128xf32>
      tpu.vector_store %arg6[%c0_114, %c0_115, %c0_116], %155 {strides = array<i32>} : memref<3x8x128xf32, #tpu.memory_space<vmem>>, vector<3x8x128xf32>,
      %cst_117 = arith.constant 0.000000e+00 : f32
      %157 = vector.broadcast %cst_117 : f32 to vector<3x8x128xf32>
      %c0_118 = arith.constant 0 : index
      %c0_119 = arith.constant 0 : index
      %c0_120 = arith.constant 0 : index
      %158 = vector.load %arg7[%c0_118, %c0_119, %c0_120] : memref<3x8x128xf32, #tpu.memory_space<vmem>>, vector<3x8x128xf32>
      tpu.vector_store %arg7[%c0_118, %c0_119, %c0_120], %157 {strides = array<i32>} : memref<3x8x128xf32, #tpu.memory_space<vmem>>, vector<3x8x128xf32>,
    } else {
    }
    %c0 = arith.constant 0 : index
    %c0_3 = arith.constant 0 : index
    %c0_4 = arith.constant 0 : index
    %c0_5 = arith.constant 0 : index
    %8 = vector.load %arg2[%c0, %c0_3, %c0_4, %c0_5] : memref<1x4x8x128xf32, #tpu.memory_space<vmem>>, vector<1x1x8x128xf32>
    %9 = vector.shape_cast %8 : vector<1x1x8x128xf32> to vector<8x128xf32>
    %c0_i32_6 = arith.constant 0 : i32
    %10 = vector.broadcast %c0_i32_6 : i32 to vector<8x128xi32>
    %c0_7 = arith.constant 0 : index
    %c1 = arith.constant 1 : index
    %c0_8 = arith.constant 0 : index
    %c0_9 = arith.constant 0 : index
    %11 = vector.load %arg2[%c0_7, %c1, %c0_8, %c0_9] : memref<1x4x8x128xf32, #tpu.memory_space<vmem>>, vector<1x1x8x128xf32>
    %12 = vector.shape_cast %11 : vector<1x1x8x128xf32> to vector<8x128xf32>
    %13 = arith.cmpf ogt, %12, %9 : vector<8x128xf32>
    %14 = arith.select %13, %12, %9 : vector<8x128xi1>, vector<8x128xf32>
    %c1_i32_10 = arith.constant 1 : i32
    %15 = vector.broadcast %c1_i32_10 : i32 to vector<8x128xi32>
    %16 = arith.select %13, %15, %10 : vector<8x128xi1>, vector<8x128xi32>
    %c0_11 = arith.constant 0 : index
    %c2 = arith.constant 2 : index
    %c0_12 = arith.constant 0 : index
    %c0_13 = arith.constant 0 : index
    %17 = vector.load %arg2[%c0_11, %c2, %c0_12, %c0_13] : memref<1x4x8x128xf32, #tpu.memory_space<vmem>>, vector<1x1x8x128xf32>
    %18 = vector.shape_cast %17 : vector<1x1x8x128xf32> to vector<8x128xf32>
    %19 = arith.cmpf ogt, %18, %14 : vector<8x128xf32>
    %20 = arith.select %19, %18, %14 : vector<8x128xi1>, vector<8x128xf32>
    %c2_i32 = arith.constant 2 : i32
    %21 = vector.broadcast %c2_i32 : i32 to vector<8x128xi32>
    %22 = arith.select %19, %21, %16 : vector<8x128xi1>, vector<8x128xi32>
    %c0_14 = arith.constant 0 : index
    %c3 = arith.constant 3 : index
    %c0_15 = arith.constant 0 : index
    %c0_16 = arith.constant 0 : index
    %23 = vector.load %arg2[%c0_14, %c3, %c0_15, %c0_16] : memref<1x4x8x128xf32, #tpu.memory_space<vmem>>, vector<1x1x8x128xf32>
    %24 = vector.shape_cast %23 : vector<1x1x8x128xf32> to vector<8x128xf32>
    %25 = arith.cmpf ogt, %24, %20 : vector<8x128xf32>
    %c3_i32 = arith.constant 3 : i32
    %26 = vector.broadcast %c3_i32 : i32 to vector<8x128xi32>
    %27 = arith.select %25, %26, %22 : vector<8x128xi1>, vector<8x128xi32>
    %c0_17 = arith.constant 0 : index
    %c0_18 = arith.constant 0 : index
    %c0_19 = arith.constant 0 : index
    %c0_20 = arith.constant 0 : index
    %28 = vector.load %arg3[%c0_17, %c0_18, %c0_19, %c0_20] : memref<1x4x8x128xf32, #tpu.memory_space<vmem>>, vector<1x1x8x128xf32>
    %29 = vector.shape_cast %28 : vector<1x1x8x128xf32> to vector<8x128xf32>
    %c0_i32_21 = arith.constant 0 : i32
    %30 = vector.broadcast %c0_i32_21 : i32 to vector<8x128xi32>
    %c0_22 = arith.constant 0 : index
    %c1_23 = arith.constant 1 : index
    %c0_24 = arith.constant 0 : index
    %c0_25 = arith.constant 0 : index
    %31 = vector.load %arg3[%c0_22, %c1_23, %c0_24, %c0_25] : memref<1x4x8x128xf32, #tpu.memory_space<vmem>>, vector<1x1x8x128xf32>
    %32 = vector.shape_cast %31 : vector<1x1x8x128xf32> to vector<8x128xf32>
    %33 = arith.cmpf ogt, %32, %29 : vector<8x128xf32>
    %34 = arith.select %33, %32, %29 : vector<8x128xi1>, vector<8x128xf32>
    %c1_i32_26 = arith.constant 1 : i32
    %35 = vector.broadcast %c1_i32_26 : i32 to vector<8x128xi32>
    %36 = arith.select %33, %35, %30 : vector<8x128xi1>, vector<8x128xi32>
    %c0_27 = arith.constant 0 : index
    %c2_28 = arith.constant 2 : index
    %c0_29 = arith.constant 0 : index
    %c0_30 = arith.constant 0 : index
    %37 = vector.load %arg3[%c0_27, %c2_28, %c0_29, %c0_30] : memref<1x4x8x128xf32, #tpu.memory_space<vmem>>, vector<1x1x8x128xf32>
    %38 = vector.shape_cast %37 : vector<1x1x8x128xf32> to vector<8x128xf32>
    %39 = arith.cmpf ogt, %38, %34 : vector<8x128xf32>
    %40 = arith.select %39, %38, %34 : vector<8x128xi1>, vector<8x128xf32>
    %c2_i32_31 = arith.constant 2 : i32
    %41 = vector.broadcast %c2_i32_31 : i32 to vector<8x128xi32>
    %42 = arith.select %39, %41, %36 : vector<8x128xi1>, vector<8x128xi32>
    %c0_32 = arith.constant 0 : index
    %c3_33 = arith.constant 3 : index
    %c0_34 = arith.constant 0 : index
    %c0_35 = arith.constant 0 : index
    %43 = vector.load %arg3[%c0_32, %c3_33, %c0_34, %c0_35] : memref<1x4x8x128xf32, #tpu.memory_space<vmem>>, vector<1x1x8x128xf32>
    %44 = vector.shape_cast %43 : vector<1x1x8x128xf32> to vector<8x128xf32>
    %45 = arith.cmpf ogt, %44, %40 : vector<8x128xf32>
    %c3_i32_36 = arith.constant 3 : i32
    %46 = vector.broadcast %c3_i32_36 : i32 to vector<8x128xi32>
    %47 = arith.select %45, %46, %42 : vector<8x128xi1>, vector<8x128xi32>
    %48 = arith.cmpi eq, %27, %47 : vector<8x128xi32>
    %c1_i32_37 = arith.constant 1 : i32
    %49 = vector.broadcast %c1_i32_37 : i32 to vector<8x128xi32>
    %50 = arith.cmpi eq, %27, %49 : vector<8x128xi32>
    %51 = arith.extui %50 : vector<8x128xi1> to vector<8x128xi32>
    %52 = arith.sitofp %51 : vector<8x128xi32> to vector<8x128xf32>
    %c1_i32_38 = arith.constant 1 : i32
    %53 = vector.broadcast %c1_i32_38 : i32 to vector<8x128xi32>
    %54 = arith.cmpi eq, %47, %53 : vector<8x128xi32>
    %55 = arith.extui %54 : vector<8x128xi1> to vector<8x128xi32>
    %56 = arith.sitofp %55 : vector<8x128xi32> to vector<8x128xf32>
    %cst = arith.constant 0.000000e+00 : f32
    %57 = vector.broadcast %cst : f32 to vector<8x128xf32>
    %58 = arith.select %48, %52, %57 : vector<8x128xi1>, vector<8x128xf32>
    %c0_39 = arith.constant 0 : index
    %c0_40 = arith.constant 0 : index
    %c0_41 = arith.constant 0 : index
    %59 = vector.load %arg6[%c0_39, %c0_40, %c0_41] : memref<3x8x128xf32, #tpu.memory_space<vmem>>, vector<1x8x128xf32>
    %60 = vector.shape_cast %59 : vector<1x8x128xf32> to vector<8x128xf32>
    %61 = vector.shape_cast %52 : vector<8x128xf32> to vector<1x8x128xf32>
    %cst_42 = arith.constant dense<0.000000e+00> : vector<8x128xf32>
    %62 = vector.multi_reduction <add>, %61, %cst_42 [0] : vector<1x8x128xf32> to vector<8x128xf32>
    %63 = arith.addf %60, %62 : vector<8x128xf32>
    %c0_43 = arith.constant 0 : index
    %c0_44 = arith.constant 0 : index
    %c0_45 = arith.constant 0 : index
    %64 = vector.load %arg6[%c0_43, %c0_44, %c0_45] : memref<3x8x128xf32, #tpu.memory_space<vmem>>, vector<1x8x128xf32>
    %65 = vector.shape_cast %64 : vector<1x8x128xf32> to vector<8x128xf32>
    %66 = vector.shape_cast %63 : vector<8x128xf32> to vector<1x8x128xf32>
    tpu.vector_store %arg6[%c0_43, %c0_44, %c0_45], %66 {strides = array<i32>} : memref<3x8x128xf32, #tpu.memory_space<vmem>>, vector<1x8x128xf32>,
    %c0_46 = arith.constant 0 : index
    %c0_47 = arith.constant 0 : index
    %c0_48 = arith.constant 0 : index
    %67 = vector.load %arg7[%c0_46, %c0_47, %c0_48] : memref<3x8x128xf32, #tpu.memory_space<vmem>>, vector<1x8x128xf32>
    %68 = vector.shape_cast %67 : vector<1x8x128xf32> to vector<8x128xf32>
    %69 = vector.shape_cast %56 : vector<8x128xf32> to vector<1x8x128xf32>
    %cst_49 = arith.constant dense<0.000000e+00> : vector<8x128xf32>
    %70 = vector.multi_reduction <add>, %69, %cst_49 [0] : vector<1x8x128xf32> to vector<8x128xf32>
    %71 = arith.addf %68, %70 : vector<8x128xf32>
    %c0_50 = arith.constant 0 : index
    %c0_51 = arith.constant 0 : index
    %c0_52 = arith.constant 0 : index
    %72 = vector.load %arg7[%c0_50, %c0_51, %c0_52] : memref<3x8x128xf32, #tpu.memory_space<vmem>>, vector<1x8x128xf32>
    %73 = vector.shape_cast %72 : vector<1x8x128xf32> to vector<8x128xf32>
    %74 = vector.shape_cast %71 : vector<8x128xf32> to vector<1x8x128xf32>
    tpu.vector_store %arg7[%c0_50, %c0_51, %c0_52], %74 {strides = array<i32>} : memref<3x8x128xf32, #tpu.memory_space<vmem>>, vector<1x8x128xf32>,
    %c0_53 = arith.constant 0 : index
    %c0_54 = arith.constant 0 : index
    %c0_55 = arith.constant 0 : index
    %75 = vector.load %arg5[%c0_53, %c0_54, %c0_55] : memref<3x8x128xf32, #tpu.memory_space<vmem>>, vector<1x8x128xf32>
    %76 = vector.shape_cast %75 : vector<1x8x128xf32> to vector<8x128xf32>
    %77 = vector.shape_cast %58 : vector<8x128xf32> to vector<1x8x128xf32>
    %cst_56 = arith.constant dense<0.000000e+00> : vector<8x128xf32>
    %78 = vector.multi_reduction <add>, %77, %cst_56 [0] : vector<1x8x128xf32> to vector<8x128xf32>
    %79 = arith.addf %76, %78 : vector<8x128xf32>
    %c0_57 = arith.constant 0 : index
    %c0_58 = arith.constant 0 : index
    %c0_59 = arith.constant 0 : index
    %80 = vector.load %arg5[%c0_57, %c0_58, %c0_59] : memref<3x8x128xf32, #tpu.memory_space<vmem>>, vector<1x8x128xf32>
    %81 = vector.shape_cast %80 : vector<1x8x128xf32> to vector<8x128xf32>
    %82 = vector.shape_cast %79 : vector<8x128xf32> to vector<1x8x128xf32>
    tpu.vector_store %arg5[%c0_57, %c0_58, %c0_59], %82 {strides = array<i32>} : memref<3x8x128xf32, #tpu.memory_space<vmem>>, vector<1x8x128xf32>,
    %c2_i32_60 = arith.constant 2 : i32
    %83 = vector.broadcast %c2_i32_60 : i32 to vector<8x128xi32>
    %84 = arith.cmpi eq, %27, %83 : vector<8x128xi32>
    %85 = arith.extui %84 : vector<8x128xi1> to vector<8x128xi32>
    %86 = arith.sitofp %85 : vector<8x128xi32> to vector<8x128xf32>
    %c2_i32_61 = arith.constant 2 : i32
    %87 = vector.broadcast %c2_i32_61 : i32 to vector<8x128xi32>
    %88 = arith.cmpi eq, %47, %87 : vector<8x128xi32>
    %89 = arith.extui %88 : vector<8x128xi1> to vector<8x128xi32>
    %90 = arith.sitofp %89 : vector<8x128xi32> to vector<8x128xf32>
    %cst_62 = arith.constant 0.000000e+00 : f32
    %91 = vector.broadcast %cst_62 : f32 to vector<8x128xf32>
    %92 = arith.select %48, %86, %91 : vector<8x128xi1>, vector<8x128xf32>
    %c1_63 = arith.constant 1 : index
    %c0_64 = arith.constant 0 : index
    %c0_65 = arith.constant 0 : index
    %93 = vector.load %arg6[%c1_63, %c0_64, %c0_65] : memref<3x8x128xf32, #tpu.memory_space<vmem>>, vector<1x8x128xf32>
    %94 = vector.shape_cast %93 : vector<1x8x128xf32> to vector<8x128xf32>
    %95 = vector.shape_cast %86 : vector<8x128xf32> to vector<1x8x128xf32>
    %cst_66 = arith.constant dense<0.000000e+00> : vector<8x128xf32>
    %96 = vector.multi_reduction <add>, %95, %cst_66 [0] : vector<1x8x128xf32> to vector<8x128xf32>
    %97 = arith.addf %94, %96 : vector<8x128xf32>
    %c1_67 = arith.constant 1 : index
    %c0_68 = arith.constant 0 : index
    %c0_69 = arith.constant 0 : index
    %98 = vector.load %arg6[%c1_67, %c0_68, %c0_69] : memref<3x8x128xf32, #tpu.memory_space<vmem>>, vector<1x8x128xf32>
    %99 = vector.shape_cast %98 : vector<1x8x128xf32> to vector<8x128xf32>
    %100 = vector.shape_cast %97 : vector<8x128xf32> to vector<1x8x128xf32>
    tpu.vector_store %arg6[%c1_67, %c0_68, %c0_69], %100 {strides = array<i32>} : memref<3x8x128xf32, #tpu.memory_space<vmem>>, vector<1x8x128xf32>,
    %c1_70 = arith.constant 1 : index
    %c0_71 = arith.constant 0 : index
    %c0_72 = arith.constant 0 : index
    %101 = vector.load %arg7[%c1_70, %c0_71, %c0_72] : memref<3x8x128xf32, #tpu.memory_space<vmem>>, vector<1x8x128xf32>
    %102 = vector.shape_cast %101 : vector<1x8x128xf32> to vector<8x128xf32>
    %103 = vector.shape_cast %90 : vector<8x128xf32> to vector<1x8x128xf32>
    %cst_73 = arith.constant dense<0.000000e+00> : vector<8x128xf32>
    %104 = vector.multi_reduction <add>, %103, %cst_73 [0] : vector<1x8x128xf32> to vector<8x128xf32>
    %105 = arith.addf %102, %104 : vector<8x128xf32>
    %c1_74 = arith.constant 1 : index
    %c0_75 = arith.constant 0 : index
    %c0_76 = arith.constant 0 : index
    %106 = vector.load %arg7[%c1_74, %c0_75, %c0_76] : memref<3x8x128xf32, #tpu.memory_space<vmem>>, vector<1x8x128xf32>
    %107 = vector.shape_cast %106 : vector<1x8x128xf32> to vector<8x128xf32>
    %108 = vector.shape_cast %105 : vector<8x128xf32> to vector<1x8x128xf32>
    tpu.vector_store %arg7[%c1_74, %c0_75, %c0_76], %108 {strides = array<i32>} : memref<3x8x128xf32, #tpu.memory_space<vmem>>, vector<1x8x128xf32>,
    %c1_77 = arith.constant 1 : index
    %c0_78 = arith.constant 0 : index
    %c0_79 = arith.constant 0 : index
    %109 = vector.load %arg5[%c1_77, %c0_78, %c0_79] : memref<3x8x128xf32, #tpu.memory_space<vmem>>, vector<1x8x128xf32>
    %110 = vector.shape_cast %109 : vector<1x8x128xf32> to vector<8x128xf32>
    %111 = vector.shape_cast %92 : vector<8x128xf32> to vector<1x8x128xf32>
    %cst_80 = arith.constant dense<0.000000e+00> : vector<8x128xf32>
    %112 = vector.multi_reduction <add>, %111, %cst_80 [0] : vector<1x8x128xf32> to vector<8x128xf32>
    %113 = arith.addf %110, %112 : vector<8x128xf32>
    %c1_81 = arith.constant 1 : index
    %c0_82 = arith.constant 0 : index
    %c0_83 = arith.constant 0 : index
    %114 = vector.load %arg5[%c1_81, %c0_82, %c0_83] : memref<3x8x128xf32, #tpu.memory_space<vmem>>, vector<1x8x128xf32>
    %115 = vector.shape_cast %114 : vector<1x8x128xf32> to vector<8x128xf32>
    %116 = vector.shape_cast %113 : vector<8x128xf32> to vector<1x8x128xf32>
    tpu.vector_store %arg5[%c1_81, %c0_82, %c0_83], %116 {strides = array<i32>} : memref<3x8x128xf32, #tpu.memory_space<vmem>>, vector<1x8x128xf32>,
    %c3_i32_84 = arith.constant 3 : i32
    %117 = vector.broadcast %c3_i32_84 : i32 to vector<8x128xi32>
    %118 = arith.cmpi eq, %27, %117 : vector<8x128xi32>
    %119 = arith.extui %118 : vector<8x128xi1> to vector<8x128xi32>
    %120 = arith.sitofp %119 : vector<8x128xi32> to vector<8x128xf32>
    %c3_i32_85 = arith.constant 3 : i32
    %121 = vector.broadcast %c3_i32_85 : i32 to vector<8x128xi32>
    %122 = arith.cmpi eq, %47, %121 : vector<8x128xi32>
    %123 = arith.extui %122 : vector<8x128xi1> to vector<8x128xi32>
    %124 = arith.sitofp %123 : vector<8x128xi32> to vector<8x128xf32>
    %cst_86 = arith.constant 0.000000e+00 : f32
    %125 = vector.broadcast %cst_86 : f32 to vector<8x128xf32>
    %126 = arith.select %48, %120, %125 : vector<8x128xi1>, vector<8x128xf32>
    %c2_87 = arith.constant 2 : index
    %c0_88 = arith.constant 0 : index
    %c0_89 = arith.constant 0 : index
    %127 = vector.load %arg6[%c2_87, %c0_88, %c0_89] : memref<3x8x128xf32, #tpu.memory_space<vmem>>, vector<1x8x128xf32>
    %128 = vector.shape_cast %127 : vector<1x8x128xf32> to vector<8x128xf32>
    %129 = vector.shape_cast %120 : vector<8x128xf32> to vector<1x8x128xf32>
    %cst_90 = arith.constant dense<0.000000e+00> : vector<8x128xf32>
    %130 = vector.multi_reduction <add>, %129, %cst_90 [0] : vector<1x8x128xf32> to vector<8x128xf32>
    %131 = arith.addf %128, %130 : vector<8x128xf32>
    %c2_91 = arith.constant 2 : index
    %c0_92 = arith.constant 0 : index
    %c0_93 = arith.constant 0 : index
    %132 = vector.load %arg6[%c2_91, %c0_92, %c0_93] : memref<3x8x128xf32, #tpu.memory_space<vmem>>, vector<1x8x128xf32>
    %133 = vector.shape_cast %132 : vector<1x8x128xf32> to vector<8x128xf32>
    %134 = vector.shape_cast %131 : vector<8x128xf32> to vector<1x8x128xf32>
    tpu.vector_store %arg6[%c2_91, %c0_92, %c0_93], %134 {strides = array<i32>} : memref<3x8x128xf32, #tpu.memory_space<vmem>>, vector<1x8x128xf32>,
    %c2_94 = arith.constant 2 : index
    %c0_95 = arith.constant 0 : index
    %c0_96 = arith.constant 0 : index
    %135 = vector.load %arg7[%c2_94, %c0_95, %c0_96] : memref<3x8x128xf32, #tpu.memory_space<vmem>>, vector<1x8x128xf32>
    %136 = vector.shape_cast %135 : vector<1x8x128xf32> to vector<8x128xf32>
    %137 = vector.shape_cast %124 : vector<8x128xf32> to vector<1x8x128xf32>
    %cst_97 = arith.constant dense<0.000000e+00> : vector<8x128xf32>
    %138 = vector.multi_reduction <add>, %137, %cst_97 [0] : vector<1x8x128xf32> to vector<8x128xf32>
    %139 = arith.addf %136, %138 : vector<8x128xf32>
    %c2_98 = arith.constant 2 : index
    %c0_99 = arith.constant 0 : index
    %c0_100 = arith.constant 0 : index
    %140 = vector.load %arg7[%c2_98, %c0_99, %c0_100] : memref<3x8x128xf32, #tpu.memory_space<vmem>>, vector<1x8x128xf32>
    %141 = vector.shape_cast %140 : vector<1x8x128xf32> to vector<8x128xf32>
    %142 = vector.shape_cast %139 : vector<8x128xf32> to vector<1x8x128xf32>
    tpu.vector_store %arg7[%c2_98, %c0_99, %c0_100], %142 {strides = array<i32>} : memref<3x8x128xf32, #tpu.memory_space<vmem>>, vector<1x8x128xf32>,
    %c2_101 = arith.constant 2 : index
    %c0_102 = arith.constant 0 : index
    %c0_103 = arith.constant 0 : index
    %143 = vector.load %arg5[%c2_101, %c0_102, %c0_103] : memref<3x8x128xf32, #tpu.memory_space<vmem>>, vector<1x8x128xf32>
    %144 = vector.shape_cast %143 : vector<1x8x128xf32> to vector<8x128xf32>
    %145 = vector.shape_cast %126 : vector<8x128xf32> to vector<1x8x128xf32>
    %cst_104 = arith.constant dense<0.000000e+00> : vector<8x128xf32>
    %146 = vector.multi_reduction <add>, %145, %cst_104 [0] : vector<1x8x128xf32> to vector<8x128xf32>
    %147 = arith.addf %144, %146 : vector<8x128xf32>
    %c2_105 = arith.constant 2 : index
    %c0_106 = arith.constant 0 : index
    %c0_107 = arith.constant 0 : index
    %148 = vector.load %arg5[%c2_105, %c0_106, %c0_107] : memref<3x8x128xf32, #tpu.memory_space<vmem>>, vector<1x8x128xf32>
    %149 = vector.shape_cast %148 : vector<1x8x128xf32> to vector<8x128xf32>
    %150 = vector.shape_cast %147 : vector<8x128xf32> to vector<1x8x128xf32>
    tpu.vector_store %arg5[%c2_105, %c0_106, %c0_107], %150 {strides = array<i32>} : memref<3x8x128xf32, #tpu.memory_space<vmem>>, vector<1x8x128xf32>,
    %151 = arith.extui %5 : i1 to i32
    %c0_i32_108 = arith.constant 0 : i32
    %152 = arith.cmpi ne, %151, %c0_i32_108 : i32
    scf.if %152 {
      %c0_109 = arith.constant 0 : index
      %c0_110 = arith.constant 0 : index
      %c0_111 = arith.constant 0 : index
      %153 = vector.load %arg5[%c0_109, %c0_110, %c0_111] : memref<3x8x128xf32, #tpu.memory_space<vmem>>, vector<1x8x128xf32>
      %154 = vector.shape_cast %153 : vector<1x8x128xf32> to vector<8x128xf32>
      %155 = vector.shape_cast %154 : vector<8x128xf32> to vector<1x8x128xf32>
      %cst_112 = arith.constant dense<0.000000e+00> : vector<1xf32>
      %156 = vector.multi_reduction <add>, %155, %cst_112 [1, 2] : vector<1x8x128xf32> to vector<1xf32>
      %157 = vector.shape_cast %156 : vector<1xf32> to vector<1x1x1xf32>
      %158 = vector.extract %157[0, 0, 0] : f32 from vector<1x1x1xf32>
      %c0_113 = arith.constant 0 : index
      %c0_114 = arith.constant 0 : index
      %c0_115 = arith.constant 0 : index
      %159 = vector.load %arg6[%c0_113, %c0_114, %c0_115] : memref<3x8x128xf32, #tpu.memory_space<vmem>>, vector<1x8x128xf32>
      %160 = vector.shape_cast %159 : vector<1x8x128xf32> to vector<8x128xf32>
      %161 = vector.shape_cast %160 : vector<8x128xf32> to vector<1x8x128xf32>
      %cst_116 = arith.constant dense<0.000000e+00> : vector<1xf32>
      %162 = vector.multi_reduction <add>, %161, %cst_116 [1, 2] : vector<1x8x128xf32> to vector<1xf32>
      %163 = vector.shape_cast %162 : vector<1xf32> to vector<1x1x1xf32>
      %164 = vector.extract %163[0, 0, 0] : f32 from vector<1x1x1xf32>
      %c0_117 = arith.constant 0 : index
      %c0_118 = arith.constant 0 : index
      %c0_119 = arith.constant 0 : index
      %165 = vector.load %arg7[%c0_117, %c0_118, %c0_119] : memref<3x8x128xf32, #tpu.memory_space<vmem>>, vector<1x8x128xf32>
      %166 = vector.shape_cast %165 : vector<1x8x128xf32> to vector<8x128xf32>
      %167 = vector.shape_cast %166 : vector<8x128xf32> to vector<1x8x128xf32>
      %cst_120 = arith.constant dense<0.000000e+00> : vector<1xf32>
      %168 = vector.multi_reduction <add>, %167, %cst_120 [1, 2] : vector<1x8x128xf32> to vector<1xf32>
      %169 = vector.shape_cast %168 : vector<1xf32> to vector<1x1x1xf32>
      %170 = vector.extract %169[0, 0, 0] : f32 from vector<1x1x1xf32>
      %171 = arith.addf %164, %170 : f32
      %172 = arith.subf %171, %158 : f32
      %cst_121 = arith.constant 9.99999997E-7 : f32
      %173 = arith.addf %158, %cst_121 : f32
      %cst_122 = arith.constant 9.99999997E-7 : f32
      %174 = arith.addf %172, %cst_122 : f32
      %175 = arith.divf %173, %174 : f32
      %cst_123 = arith.constant 2.000000e+00 : f32
      %176 = arith.mulf %cst_123, %175 : f32
      %cst_124 = arith.constant 1.000000e+00 : f32
      %177 = arith.addf %cst_124, %175 : f32
      %178 = arith.divf %176, %177 : f32
      %cst_125 = arith.constant 0.000000e+00 : f32
      %179 = arith.addf %cst_125, %178 : f32
      %c1_126 = arith.constant 1 : index
      %c0_127 = arith.constant 0 : index
      %c0_128 = arith.constant 0 : index
      %180 = vector.load %arg5[%c1_126, %c0_127, %c0_128] : memref<3x8x128xf32, #tpu.memory_space<vmem>>, vector<1x8x128xf32>
      %181 = vector.shape_cast %180 : vector<1x8x128xf32> to vector<8x128xf32>
      %182 = vector.shape_cast %181 : vector<8x128xf32> to vector<1x8x128xf32>
      %cst_129 = arith.constant dense<0.000000e+00> : vector<1xf32>
      %183 = vector.multi_reduction <add>, %182, %cst_129 [1, 2] : vector<1x8x128xf32> to vector<1xf32>
      %184 = vector.shape_cast %183 : vector<1xf32> to vector<1x1x1xf32>
      %185 = vector.extract %184[0, 0, 0] : f32 from vector<1x1x1xf32>
      %c1_130 = arith.constant 1 : index
      %c0_131 = arith.constant 0 : index
      %c0_132 = arith.constant 0 : index
      %186 = vector.load %arg6[%c1_130, %c0_131, %c0_132] : memref<3x8x128xf32, #tpu.memory_space<vmem>>, vector<1x8x128xf32>
      %187 = vector.shape_cast %186 : vector<1x8x128xf32> to vector<8x128xf32>
      %188 = vector.shape_cast %187 : vector<8x128xf32> to vector<1x8x128xf32>
      %cst_133 = arith.constant dense<0.000000e+00> : vector<1xf32>
      %189 = vector.multi_reduction <add>, %188, %cst_133 [1, 2] : vector<1x8x128xf32> to vector<1xf32>
      %190 = vector.shape_cast %189 : vector<1xf32> to vector<1x1x1xf32>
      %191 = vector.extract %190[0, 0, 0] : f32 from vector<1x1x1xf32>
      %c1_134 = arith.constant 1 : index
      %c0_135 = arith.constant 0 : index
      %c0_136 = arith.constant 0 : index
      %192 = vector.load %arg7[%c1_134, %c0_135, %c0_136] : memref<3x8x128xf32, #tpu.memory_space<vmem>>, vector<1x8x128xf32>
      %193 = vector.shape_cast %192 : vector<1x8x128xf32> to vector<8x128xf32>
      %194 = vector.shape_cast %193 : vector<8x128xf32> to vector<1x8x128xf32>
      %cst_137 = arith.constant dense<0.000000e+00> : vector<1xf32>
      %195 = vector.multi_reduction <add>, %194, %cst_137 [1, 2] : vector<1x8x128xf32> to vector<1xf32>
      %196 = vector.shape_cast %195 : vector<1xf32> to vector<1x1x1xf32>
      %197 = vector.extract %196[0, 0, 0] : f32 from vector<1x1x1xf32>
      %198 = arith.addf %191, %197 : f32
      %199 = arith.subf %198, %185 : f32
      %cst_138 = arith.constant 9.99999997E-7 : f32
      %200 = arith.addf %185, %cst_138 : f32
      %cst_139 = arith.constant 9.99999997E-7 : f32
      %201 = arith.addf %199, %cst_139 : f32
      %202 = arith.divf %200, %201 : f32
      %cst_140 = arith.constant 2.000000e+00 : f32
      %203 = arith.mulf %cst_140, %202 : f32
      %cst_141 = arith.constant 1.000000e+00 : f32
      %204 = arith.addf %cst_141, %202 : f32
      %205 = arith.divf %203, %204 : f32
      %206 = arith.addf %179, %205 : f32
      %c2_142 = arith.constant 2 : index
      %c0_143 = arith.constant 0 : index
      %c0_144 = arith.constant 0 : index
      %207 = vector.load %arg5[%c2_142, %c0_143, %c0_144] : memref<3x8x128xf32, #tpu.memory_space<vmem>>, vector<1x8x128xf32>
      %208 = vector.shape_cast %207 : vector<1x8x128xf32> to vector<8x128xf32>
      %209 = vector.shape_cast %208 : vector<8x128xf32> to vector<1x8x128xf32>
      %cst_145 = arith.constant dense<0.000000e+00> : vector<1xf32>
      %210 = vector.multi_reduction <add>, %209, %cst_145 [1, 2] : vector<1x8x128xf32> to vector<1xf32>
      %211 = vector.shape_cast %210 : vector<1xf32> to vector<1x1x1xf32>
      %212 = vector.extract %211[0, 0, 0] : f32 from vector<1x1x1xf32>
      %c2_146 = arith.constant 2 : index
      %c0_147 = arith.constant 0 : index
      %c0_148 = arith.constant 0 : index
      %213 = vector.load %arg6[%c2_146, %c0_147, %c0_148] : memref<3x8x128xf32, #tpu.memory_space<vmem>>, vector<1x8x128xf32>
      %214 = vector.shape_cast %213 : vector<1x8x128xf32> to vector<8x128xf32>
      %215 = vector.shape_cast %214 : vector<8x128xf32> to vector<1x8x128xf32>
      %cst_149 = arith.constant dense<0.000000e+00> : vector<1xf32>
      %216 = vector.multi_reduction <add>, %215, %cst_149 [1, 2] : vector<1x8x128xf32> to vector<1xf32>
      %217 = vector.shape_cast %216 : vector<1xf32> to vector<1x1x1xf32>
      %218 = vector.extract %217[0, 0, 0] : f32 from vector<1x1x1xf32>
      %c2_150 = arith.constant 2 : index
      %c0_151 = arith.constant 0 : index
      %c0_152 = arith.constant 0 : index
      %219 = vector.load %arg7[%c2_150, %c0_151, %c0_152] : memref<3x8x128xf32, #tpu.memory_space<vmem>>, vector<1x8x128xf32>
      %220 = vector.shape_cast %219 : vector<1x8x128xf32> to vector<8x128xf32>
      %221 = vector.shape_cast %220 : vector<8x128xf32> to vector<1x8x128xf32>
      %cst_153 = arith.constant dense<0.000000e+00> : vector<1xf32>
      %222 = vector.multi_reduction <add>, %221, %cst_153 [1, 2] : vector<1x8x128xf32> to vector<1xf32>
      %223 = vector.shape_cast %222 : vector<1xf32> to vector<1x1x1xf32>
      %224 = vector.extract %223[0, 0, 0] : f32 from vector<1x1x1xf32>
      %225 = arith.addf %218, %224 : f32
      %226 = arith.subf %225, %212 : f32
      %cst_154 = arith.constant 9.99999997E-7 : f32
      %227 = arith.addf %212, %cst_154 : f32
      %cst_155 = arith.constant 9.99999997E-7 : f32
      %228 = arith.addf %226, %cst_155 : f32
      %229 = arith.divf %227, %228 : f32
      %cst_156 = arith.constant 2.000000e+00 : f32
      %230 = arith.mulf %cst_156, %229 : f32
      %cst_157 = arith.constant 1.000000e+00 : f32
      %231 = arith.addf %cst_157, %229 : f32
      %232 = arith.divf %230, %231 : f32
      %233 = arith.addf %206, %232 : f32
      %cst_158 = arith.constant 3.000000e+00 : f32
      %234 = arith.divf %233, %cst_158 : f32
      %235 = vector.broadcast %234 : f32 to vector<1x1xf32>
      %c0_159 = arith.constant 0 : index
      %c0_160 = arith.constant 0 : index
      %236 = vector.load %arg4[%c0_159, %c0_160] : memref<1x1xf32, #tpu.memory_space<vmem>>, vector<1x1xf32>
      tpu.vector_store %arg4[%c0_159, %c0_160], %235 {strides = array<i32>} : memref<1x1xf32, #tpu.memory_space<vmem>>, vector<1x1xf32>,
    } else {
    }
    return
  }
  func.func @transform_0(%arg0: i32, %arg1: i32) -> (i32, i32, i32, i32) {
    %c0_i32 = arith.constant 0 : i32
    %c0_i32_0 = arith.constant 0 : i32
    %c0_i32_1 = arith.constant 0 : i32
    return %arg0, %c0_i32, %arg1, %c0_i32_0 : i32, i32, i32, i32
  }
  func.func @transform_1(%arg0: i32, %arg1: i32) -> (i32, i32, i32, i32) {
    %c0_i32 = arith.constant 0 : i32
    %c0_i32_0 = arith.constant 0 : i32
    %c0_i32_1 = arith.constant 0 : i32
    return %arg0, %c0_i32, %arg1, %c0_i32_0 : i32, i32, i32, i32
  }
  func.func @transform_2(%arg0: i32, %arg1: i32) -> (i32, i32) {
    %c0_i32 = arith.constant 0 : i32
    %c0_i32_0 = arith.constant 0 : i32
    %c0_i32_1 = arith.constant 0 : i32
    return %c0_i32, %c0_i32_0 : i32, i32
  }
}

</mosaic_0001>

<llo_original>
// kernel: tpu_custom_call.1
$region0: #{tpu_custom_call.1}
  #allocation0 [shape = 'u32[]', space=smem, size = 0x4, offset = 0x4, fixed_abs, tag = 'smem constant byte address 0x4 - core index']
  #allocation1 [shape = 'u32[144,128]{1,0:T(1,128)}', space=vmem, size = 0x12000, scoped, tag = 'internal scratch']
  #allocation2 [shape = 'f32[3,8,128]{2,1,0:T(8,128)}', space=vmem, size = 0x3000, scoped, tag = 'scratch operand']
  #allocation3 [shape = 'f32[3,8,128]{2,1,0:T(8,128)}', space=vmem, size = 0x3000, scoped, tag = 'scratch operand']
  #allocation4 [shape = 'f32[3,8,128]{2,1,0:T(8,128)}', space=vmem, size = 0x3000, scoped, tag = 'scratch operand']
  %s0 = inlined_call_operand.hbm [shape: f32[2,4,8,128], index: 0, kind: input, shape index: {}]
  %s1 = inlined_call_operand.hbm [shape: f32[2,4,8,128], index: 1, kind: input, shape index: {}]
  %s2 = inlined_call_operand.hbm [shape: f32[1,1], index: 2, kind: output, shape index: {}]
  %s3 = sld [smem:[#allocation0]]
  $region57: #{tpu_custom_call.1} parent=0
    _
  %s5 = ssub.s32 1, %s3
  %s6 = scalar_select 0, %s5, %s3
  $region1: #{tpu_custom_call.1} parent=0
    #allocation5 [shape = 'u8[32768]{0}', space=vmem, size = 0x8000, scoped, tag = 'input window, operand 0']
    #allocation6 [shape = 's32[2]{0}', space=sflag, size = 0x8, scoped, tag = 'scoped memory for tpu_custom_call.1']
    #allocation7 [shape = 's32[2]{0}', space=sflag, size = 0x8, scoped, tag = 'scoped memory for tpu_custom_call.1']
    #allocation8 [shape = 'u8[32768]{0}', space=vmem, size = 0x8000, scoped, tag = 'input window, operand 1']
    #allocation9 [shape = 's32[2]{0}', space=sflag, size = 0x8, scoped, tag = 'scoped memory for tpu_custom_call.1']
    #allocation10 [shape = 'u8[512]{0}', space=vmem, size = 0x400, scoped, tag = 'output window, operand 0, single buffered']
    %7 = vsyncpa [#allocation6], 0
    %s8 = scalar_lea.sflag [#allocation6], 1
    %9 = vsyncpa %s8, 0
    %10 = vsyncpa [#allocation9], 0
    %s11 = scalar_lea.sflag [#allocation9], 1
    %12 = vsyncpa %s11, 0
    %13 = vsyncpa [#allocation7], 0
    loop: start=0, step=1, limit=4
    $region2: #{tpu_custom_call.1} parent=1 // loop_pre_header
      _
    $region3: #{tpu_custom_call.1} parent=1 // loop_header
      %s15 = sphi 0, %s19
      %p16 = scmp.ge.s32.totalorder %s15, 4
      %s22 = sphi 0, %s34
      %s23 = sphi 0, %s30
      %s24 = sphi 0, %s22
      %s25 = sphi 0, %s23
      %s26 = sphi 0, %s24
      %s27 = sphi 0, %s25
      %s39 = sphi 0, %s41
      %s42 = sphi 0, %s39
      %s43 = sphi 0, %s42
      %s59 = sphi 0, %s43
      %s67 = sphi 0, %s69
      %s70 = sphi 0, %s67
      %s71 = sphi 0, %s70
      %s87 = sphi 0, %s71
      %s91 = sphi 0, %s91
      %s93 = sphi 0, %s91
      %s94 = sphi 0, %s93
      %s108 = sphi 0, %s94
    $region4: #{tpu_custom_call.1} parent=1 // loop_header_branch
      %18 = sbr.rel (%p16) target = $region8
    $region5: #{tpu_custom_call.1} parent=1 // loop_body
      %s20 = ssub.s32 %s15, 1
      %s21 = ssub.s32 %s15, 2
      %s28 = sadd.s32 1, %s23
      %p29 = scmp.ge.s32.totalorder %s28, 1
      %s30 = scalar_select %p29, 0, %s28
      %s31 = sadd.s32 1, %s22
      %s32 = scalar_select %p29, %s31, %s22
      %p33 = scmp.ge.s32.totalorder %s32, 2
      %s34 = scalar_select %p33, 0, %s32
      %s35 = ssub.s32 %s22, %s34
      %s36 = ssub.s32 %s23, %s30
      %s37 = sor.u32 %s35, %s36
      %p38 = scmp.eq.s32.totalorder %s37, 0
      %s40 = sadd.s32 %s39, 1
      %s41 = scalar_select %p38, %s39, %s40
      %p44 = pneg %p38
      %p45 = scmp.eq.s32.totalorder %s15, 1
      %p46 = por %p44, %p45
      %p47 = scmp.ne.s32.totalorder %s39, %s42
      %p48 = scmp.eq.s32.totalorder %s15, 0
      %p49 = por %p47, %p48
      %p50 = scmp.ne.s32.totalorder %s39, %s42
      %p51 = scmp.eq.s32.totalorder %s20, 1
      %p52 = por %p50, %p51
      %p53 = scmp.ne.s32.totalorder %s42, %s43
      %p54 = scmp.eq.s32.totalorder %s20, 0
      %p55 = por %p53, %p54
      %p56 = scmp.ne.s32.totalorder %s42, %s43
      %p57 = scmp.eq.s32.totalorder %s21, 1
      %p58 = por %p56, %p57
      %p60 = scmp.ne.s32.totalorder %s43, %s59
      %p61 = scmp.eq.s32.totalorder %s21, 0
      %p62 = por %p60, %p61
      %s63 = ssub.s32 %s22, %s34
      %s64 = ssub.s32 %s23, %s30
      %s65 = sor.u32 %s63, %s64
      %p66 = scmp.eq.s32.totalorder %s65, 0
      %s68 = sadd.s32 %s67, 1
      %s69 = scalar_select %p66, %s67, %s68
      %p72 = pneg %p66
      %p73 = scmp.eq.s32.totalorder %s15, 1
      %p74 = por %p72, %p73
      %p75 = scmp.ne.s32.totalorder %s67, %s70
      %p76 = scmp.eq.s32.totalorder %s15, 0
      %p77 = por %p75, %p76
      %p78 = scmp.ne.s32.totalorder %s67, %s70
      %p79 = scmp.eq.s32.totalorder %s20, 1
      %p80 = por %p78, %p79
      %p81 = scmp.ne.s32.totalorder %s70, %s71
      %p82 = scmp.eq.s32.totalorder %s20, 0
      %p83 = por %p81, %p82
      %p84 = scmp.ne.s32.totalorder %s70, %s71
      %p85 = scmp.eq.s32.totalorder %s21, 1
      %p86 = por %p84, %p85
      %p88 = scmp.ne.s32.totalorder %s71, %s87
      %p89 = scmp.eq.s32.totalorder %s21, 0
      %p90 = por %p88, %p89
      %s92 = sadd.s32 %s91, 1
      %p95 = scmp.eq.s32.totalorder %s15, 1
      %p96 = scmp.ne.s32.totalorder %s91, %s93
      %p97 = scmp.eq.s32.totalorder %s15, 0
      %p98 = por %p96, %p97
      %p99 = scmp.ne.s32.totalorder %s91, %s93
      %p100 = scmp.eq.s32.totalorder %s20, 1
      %p101 = por %p99, %p100
      %p102 = scmp.ne.s32.totalorder %s93, %s94
      %p103 = scmp.eq.s32.totalorder %s20, 0
      %p104 = por %p102, %p103
      %p105 = scmp.ne.s32.totalorder %s93, %s94
      %p106 = scmp.eq.s32.totalorder %s21, 1
      %p107 = por %p105, %p106
      %p109 = scmp.ne.s32.totalorder %s94, %s108
      %p110 = scmp.eq.s32.totalorder %s21, 0
      %p111 = por %p109, %p110
      %p112 = scmp.le.s32.totalorder 1, %s15
      %p113 = scmp.lt.s32.totalorder %s15, 3
      %p114 = pnand %p112, %p113
      %p115 = pneg %p114
      // Predicated region
      $region9: #{tpu_custom_call.1} parent=5 // pred_check
        _
      $region10: #{tpu_custom_call.1} parent=5 // pred_check_branch
        %117 = sbr.rel (%p114) target = $region12
      $region11: #{tpu_custom_call.1} parent=5 // pred_region
        %s118 = ssub.s32 %s15, 1
      $region12: #{tpu_custom_call.1} parent=5 // pred_fallthru
        _
      %p119 = scmp.lt.s32.totalorder %s15, 2
      // Predicated region
      $region13: #{tpu_custom_call.1} parent=5 // pred_check
        %p120 = pneg %p119
      $region14: #{tpu_custom_call.1} parent=5 // pred_check_branch
        %122 = sbr.rel (%p120) target = $region16
      $region15: #{tpu_custom_call.1} parent=5 // pred_region
        // Predicated region
        $region17: #{tpu_custom_call.1} parent=15 // pred_check
          %p123 = pneg %p49
        $region18: #{tpu_custom_call.1} parent=15 // pred_check_branch
          %125 = sbr.rel (%p123) target = $region20
        $region19: #{tpu_custom_call.1} parent=15 // pred_region
          %s126 = sand.u32 %s39, 1
          %s127 = scalar_lea.sflag [#allocation6], %s126
          %s128 = sand.u32 %s39, 1
          %s129 = smul.addr %s128, 32
          %s130 = scalar_lea.vmem [#allocation5], %s129
          %s132 = ssub.s32 512, 512
          %133 = vsyncadd %s127, %s132
          %s134 = smul.addr %s22, 4
          %s135 = sadd.s32 %s23, %s134
          %s136 = smul.addr %s135, 128
          %s137 = scalar_lea.hbm %s0, %s136
          %s138 = sshll.u32 %s130, 4
          %s139 = int_to_ptr.vmem [resolvable:$true] %s138
          %144 = dma.hbm_to_vmem [thread:$0]  %s137, 512, %s139, %s127, 128, 128, 8
        $region20: #{tpu_custom_call.1} parent=15 // pred_fallthru
          _
        // Predicated region
        $region21: #{tpu_custom_call.1} parent=15 // pred_check
          %p145 = pneg %p77
        $region22: #{tpu_custom_call.1} parent=15 // pred_check_branch
          %147 = sbr.rel (%p145) target = $region24
        $region23: #{tpu_custom_call.1} parent=15 // pred_region
          %s148 = sand.u32 %s67, 1
          %s149 = scalar_lea.sflag [#allocation9], %s148
          %s150 = sand.u32 %s67, 1
          %s151 = smul.addr %s150, 32
          %s152 = scalar_lea.vmem [#allocation8], %s151
          %s154 = ssub.s32 512, 512
          %155 = vsyncadd %s149, %s154
          %s156 = smul.addr %s22, 4
          %s157 = sadd.s32 %s23, %s156
          %s158 = smul.addr %s157, 128
          %s159 = scalar_lea.hbm %s1, %s158
          %s160 = sshll.u32 %s152, 4
          %s161 = int_to_ptr.vmem [resolvable:$true] %s160
          %166 = dma.hbm_to_vmem [thread:$0]  %s159, 512, %s161, %s149, 128, 128, 8
        $region24: #{tpu_custom_call.1} parent=15 // pred_fallthru
          _
      $region16: #{tpu_custom_call.1} parent=5 // pred_fallthru
        _
      %p167 = scmp.le.s32.totalorder 1, %s15
      %p168 = scmp.lt.s32.totalorder %s15, 3
      %p169 = pnand %p167, %p168
      %p170 = pneg %p169
      // Predicated region
      $region25: #{tpu_custom_call.1} parent=5 // pred_check
        _
      $region26: #{tpu_custom_call.1} parent=5 // pred_check_branch
        %172 = sbr.rel (%p169) target = $region28
      $region27: #{tpu_custom_call.1} parent=5 // pred_region
        %s173 = ssub.s32 %s15, 1
        %s174 = sand.u32 %s42, 1
        %s175 = scalar_lea.sflag [#allocation6], %s174
        %s176 = sand.u32 %s42, 1
        %s177 = smul.addr %s176, 32
        %s178 = scalar_lea.vmem [#allocation5], %s177
        // Predicated region
        $region29: #{tpu_custom_call.1} parent=27 // pred_check
          %p179 = pneg %p55
        $region30: #{tpu_custom_call.1} parent=27 // pred_check_branch
          %181 = sbr.rel (%p179) target = $region32
        $region31: #{tpu_custom_call.1} parent=27 // pred_region
          %182 = dma.done %s175, 512
        $region32: #{tpu_custom_call.1} parent=27 // pred_fallthru
          _
        %s183 = sand.u32 %s70, 1
        %s184 = scalar_lea.sflag [#allocation9], %s183
        %s185 = sand.u32 %s70, 1
        %s186 = smul.addr %s185, 32
        %s187 = scalar_lea.vmem [#allocation8], %s186
        // Predicated region
        $region33: #{tpu_custom_call.1} parent=27 // pred_check
          %p188 = pneg %p83
        $region34: #{tpu_custom_call.1} parent=27 // pred_check_branch
          %190 = sbr.rel (%p188) target = $region36
        $region35: #{tpu_custom_call.1} parent=27 // pred_region
          %191 = dma.done %s184, 512
        $region36: #{tpu_custom_call.1} parent=27 // pred_fallthru
          _
        %s192 = sand.u32 %s42, 1
        %s193 = scalar_lea.sflag [#allocation6], %s192
        %s194 = sand.u32 %s42, 1
        %s195 = smul.addr %s194, 32
        %s196 = scalar_lea.vmem [#allocation5], %s195
        %p197 = pneg %p55
        %p198 = pneg %p52
        %s199 = sand.u32 %s70, 1
        %s200 = scalar_lea.sflag [#allocation9], %s199
        %s201 = sand.u32 %s70, 1
        %s202 = smul.addr %s201, 32
        %s203 = scalar_lea.vmem [#allocation8], %s202
        %p204 = pneg %p83
        %p205 = pneg %p80
        %p206 = pneg %p104
        %p207 = pneg %p101
        %p208 = scmp.eq.s32.totalorder %s24, 0
        %p209 = scmp.eq.s32.totalorder %s25, 0
        %p210 = pnand %p208, %p209
        %p211 = pneg %p210
        %p212 = scmp.eq.s32.totalorder %s24, 1
        %p213 = pnand %p212, %p209
        %p214 = pneg %p213
        // Predicated region
        $region37: #{tpu_custom_call.1} parent=27 // pred_check
          _
        $region38: #{tpu_custom_call.1} parent=27 // pred_check_branch
          %216 = sbr.rel (%p210) target = $region40
        $region39: #{tpu_custom_call.1} parent=27 // pred_region
          %217 = vst [vmem:[#allocation2] sm:$0xff] 0.0
          %218 = vst [vmem:[#allocation2 + $0x8] sm:$0xff] 0.0
          %219 = vst [vmem:[#allocation2 + $0x10] sm:$0xff] 0.0
          %220 = vst [vmem:[#allocation3] sm:$0xff] 0.0
          %221 = vst [vmem:[#allocation3 + $0x8] sm:$0xff] 0.0
          %222 = vst [vmem:[#allocation3 + $0x10] sm:$0xff] 0.0
          %223 = vst [vmem:[#allocation4] sm:$0xff] 0.0
          %224 = vst [vmem:[#allocation4 + $0x8] sm:$0xff] 0.0
          %225 = vst [vmem:[#allocation4 + $0x10] sm:$0xff] 0.0
        $region40: #{tpu_custom_call.1} parent=27 // pred_fallthru
          _
        %v226 = vld [vmem:[%s178] sm:$0xff]
        %s227 = scalar_lea.vmem %s178, 8 [#allocation5]
        %v228 = vld [vmem:[%s227] sm:$0xff]
        %vm229 = vcmp.gt.f32.partialorder %v228, %v226
        %v230 = vsel %vm229, %v228, %v226
        %v231 = vsel %vm229, 1, 0
        %s232 = scalar_lea.vmem %s178, 16 [#allocation5]
        %v233 = vld [vmem:[%s232] sm:$0xff]
        %vm234 = vcmp.gt.f32.partialorder %v233, %v230
        %v235 = vsel %vm234, %v233, %v230
        %v236 = vsel %vm234, 2, %v231
        %s237 = scalar_lea.vmem %s178, 24 [#allocation5]
        %v238 = vld [vmem:[%s237] sm:$0xff]
        %vm239 = vcmp.gt.f32.partialorder %v238, %v235
        %v240 = vsel %vm239, 3, %v236
        %v241 = vld [vmem:[%s187] sm:$0xff]
        %s242 = scalar_lea.vmem %s187, 8 [#allocation8]
        %v243 = vld [vmem:[%s242] sm:$0xff]
        %vm244 = vcmp.gt.f32.partialorder %v243, %v241
        %v245 = vsel %vm244, %v243, %v241
        %v246 = vsel %vm244, 1, 0
        %s247 = scalar_lea.vmem %s187, 16 [#allocation8]
        %v248 = vld [vmem:[%s247] sm:$0xff]
        %vm249 = vcmp.gt.f32.partialorder %v248, %v245
        %v250 = vsel %vm249, %v248, %v245
        %v251 = vsel %vm249, 2, %v246
        %s252 = scalar_lea.vmem %s187, 24 [#allocation8]
        %v253 = vld [vmem:[%s252] sm:$0xff]
        %vm254 = vcmp.gt.f32.partialorder %v253, %v250
        %v255 = vsel %vm254, 3, %v251
        %vm256 = vcmp.eq.s32.totalorder %v240, %v255
        %vm257 = vcmp.eq.s32.totalorder %v240, 1
        %v258 = vsel %vm257, 1, 0
        %v259 = vcvt.s32.f32 %v258
        %vm260 = vcmp.eq.s32.totalorder %v255, 1
        %v261 = vsel %vm260, 1, 0
        %v262 = vcvt.s32.f32 %v261
        %v263 = vsel %vm256, %v259, 0.0
        %v264 = vld [vmem:[#allocation3] sm:$0xff]
        %v265 = vadd.f32 %v259, 0.0
        %v266 = vadd.f32 %v264, %v265
        %267 = vst [vmem:[#allocation3] sm:$0xff] %v266
        %v268 = vld [vmem:[#allocation4] sm:$0xff]
        %v269 = vadd.f32 %v262, 0.0
        %v270 = vadd.f32 %v268, %v269
        %271 = vst [vmem:[#allocation4] sm:$0xff] %v270
        %v272 = vld [vmem:[#allocation2] sm:$0xff]
        %v273 = vadd.f32 %v263, 0.0
        %v274 = vadd.f32 %v272, %v273
        %275 = vst [vmem:[#allocation2] sm:$0xff] %v274
        %vm276 = vcmp.eq.s32.totalorder %v240, 2
        %v277 = vsel %vm276, 1, 0
        %v278 = vcvt.s32.f32 %v277
        %vm279 = vcmp.eq.s32.totalorder %v255, 2
        %v280 = vsel %vm279, 1, 0
        %v281 = vcvt.s32.f32 %v280
        %v282 = vsel %vm256, %v278, 0.0
        %s283 = scalar_lea.vmem [#allocation3], 8
        %v284 = vld [vmem:[%s283] sm:$0xff]
        %v285 = vadd.f32 %v278, 0.0
        %v286 = vadd.f32 %v284, %v285
        %287 = vst [vmem:[%s283] sm:$0xff] %v286
        %s288 = scalar_lea.vmem [#allocation4], 8
        %v289 = vld [vmem:[%s288] sm:$0xff]
        %v290 = vadd.f32 %v281, 0.0
        %v291 = vadd.f32 %v289, %v290
        %292 = vst [vmem:[%s288] sm:$0xff] %v291
        %s293 = scalar_lea.vmem [#allocation2], 8
        %v294 = vld [vmem:[%s293] sm:$0xff]
        %v295 = vadd.f32 %v282, 0.0
        %v296 = vadd.f32 %v294, %v295
        %297 = vst [vmem:[%s293] sm:$0xff] %v296
        %vm298 = vcmp.eq.s32.totalorder %v240, 3
        %v299 = vsel %vm298, 1, 0
        %v300 = vcvt.s32.f32 %v299
        %vm301 = vcmp.eq.s32.totalorder %v255, 3
        %v302 = vsel %vm301, 1, 0
        %v303 = vcvt.s32.f32 %v302
        %v304 = vsel %vm256, %v300, 0.0
        %s305 = scalar_lea.vmem [#allocation3], 16
        %v306 = vld [vmem:[%s305] sm:$0xff]
        %v307 = vadd.f32 %v300, 0.0
        %v308 = vadd.f32 %v306, %v307
        %309 = vst [vmem:[%s305] sm:$0xff] %v308
        %s310 = scalar_lea.vmem [#allocation4], 16
        %v311 = vld [vmem:[%s310] sm:$0xff]
        %v312 = vadd.f32 %v303, 0.0
        %v313 = vadd.f32 %v311, %v312
        %314 = vst [vmem:[%s310] sm:$0xff] %v313
        %s315 = scalar_lea.vmem [#allocation2], 16
        %v316 = vld [vmem:[%s315] sm:$0xff]
        %v317 = vadd.f32 %v304, 0.0
        %v318 = vadd.f32 %v316, %v317
        %319 = vst [vmem:[%s315] sm:$0xff] %v318
        // Predicated region
        $region41: #{tpu_custom_call.1} parent=27 // pred_check
          _
        $region42: #{tpu_custom_call.1} parent=27 // pred_check_branch
          %321 = sbr.rel (%p213) target = $region44
        $region43: #{tpu_custom_call.1} parent=27 // pred_region
          %v322 = vld [vmem:[#allocation2] sm:$0xff]
          %323 = vadd.xlane.f32.xlu0 %v322
          %v324 = vpop.xlane.xlu0 %323
          %v325 = vrot.slane %v324, 4
          %v326 = vadd.f32 %v324, %v325
          %v327 = vrot.slane %v326, 2
          %v328 = vadd.f32 %v326, %v327
          %v329 = vrot.slane %v328, 1
          %v330 = vadd.f32 %v328, %v329
          %s331 = vtos %v330
          %v332 = vld [vmem:[#allocation3] sm:$0xff]
          %333 = vadd.xlane.f32.xlu0 %v332
          %v334 = vpop.xlane.xlu0 %333
          %v335 = vrot.slane %v334, 4
          %v336 = vadd.f32 %v334, %v335
          %v337 = vrot.slane %v336, 2
          %v338 = vadd.f32 %v336, %v337
          %v339 = vrot.slane %v338, 1
          %v340 = vadd.f32 %v338, %v339
          %s341 = vtos %v340
          %v342 = vld [vmem:[#allocation4] sm:$0xff]
          %343 = vadd.xlane.f32.xlu0 %v342
          %v344 = vpop.xlane.xlu0 %343
          %v345 = vrot.slane %v344, 4
          %v346 = vadd.f32 %v344, %v345
          %v347 = vrot.slane %v346, 2
          %v348 = vadd.f32 %v346, %v347
          %v349 = vrot.slane %v348, 1
          %v350 = vadd.f32 %v348, %v349
          %s351 = vtos %v350
          %s352 = sadd.f32 %s341, %s351
          %s353 = ssub.f32 %s352, %s331
          %s354 = sadd.f32 %s331, 1e-06
          %s355 = sadd.f32 %s353, 1e-06
          %v356 = vstv %s355
          %v357 = vrcp.pop %v356
          %s358 = vtos %v357
          %s359 = smul.f32 %s354, %s358
          %s360 = smul.f32 %s359, 2.0
          %s361 = sadd.f32 %s359, 1.0
          %v362 = vstv %s361
          %v363 = vrcp.pop %v362
          %s364 = vtos %v363
          %s365 = smul.f32 %s360, %s364
          %s366 = sadd.f32 %s365, 0.0
          %v367 = vld [vmem:[%s293] sm:$0xff]
          %368 = vadd.xlane.f32.xlu0 %v367
          %v369 = vpop.xlane.xlu0 %368
          %v370 = vrot.slane %v369, 4
          %v371 = vadd.f32 %v369, %v370
          %v372 = vrot.slane %v371, 2
          %v373 = vadd.f32 %v371, %v372
          %v374 = vrot.slane %v373, 1
          %v375 = vadd.f32 %v373, %v374
          %s376 = vtos %v375
          %v377 = vld [vmem:[%s283] sm:$0xff]
          %378 = vadd.xlane.f32.xlu0 %v377
          %v379 = vpop.xlane.xlu0 %378
          %v380 = vrot.slane %v379, 4
          %v381 = vadd.f32 %v379, %v380
          %v382 = vrot.slane %v381, 2
          %v383 = vadd.f32 %v381, %v382
          %v384 = vrot.slane %v383, 1
          %v385 = vadd.f32 %v383, %v384
          %s386 = vtos %v385
          %v387 = vld [vmem:[%s288] sm:$0xff]
          %388 = vadd.xlane.f32.xlu0 %v387
          %v389 = vpop.xlane.xlu0 %388
          %v390 = vrot.slane %v389, 4
          %v391 = vadd.f32 %v389, %v390
          %v392 = vrot.slane %v391, 2
          %v393 = vadd.f32 %v391, %v392
          %v394 = vrot.slane %v393, 1
          %v395 = vadd.f32 %v393, %v394
          %s396 = vtos %v395
          %s397 = sadd.f32 %s386, %s396
          %s398 = ssub.f32 %s397, %s376
          %s399 = sadd.f32 %s376, 1e-06
          %s400 = sadd.f32 %s398, 1e-06
          %v401 = vstv %s400
          %v402 = vrcp.pop %v401
          %s403 = vtos %v402
          %s404 = smul.f32 %s399, %s403
          %s405 = smul.f32 %s404, 2.0
          %s406 = sadd.f32 %s404, 1.0
          %v407 = vstv %s406
          %v408 = vrcp.pop %v407
          %s409 = vtos %v408
          %s410 = smul.f32 %s405, %s409
          %s411 = sadd.f32 %s366, %s410
          %v412 = vld [vmem:[%s315] sm:$0xff]
          %413 = vadd.xlane.f32.xlu0 %v412
          %v414 = vpop.xlane.xlu0 %413
          %v415 = vrot.slane %v414, 4
          %v416 = vadd.f32 %v414, %v415
          %v417 = vrot.slane %v416, 2
          %v418 = vadd.f32 %v416, %v417
          %v419 = vrot.slane %v418, 1
          %v420 = vadd.f32 %v418, %v419
          %s421 = vtos %v420
          %v422 = vld [vmem:[%s305] sm:$0xff]
          %423 = vadd.xlane.f32.xlu0 %v422
          %v424 = vpop.xlane.xlu0 %423
          %v425 = vrot.slane %v424, 4
          %v426 = vadd.f32 %v424, %v425
          %v427 = vrot.slane %v426, 2
          %v428 = vadd.f32 %v426, %v427
          %v429 = vrot.slane %v428, 1
          %v430 = vadd.f32 %v428, %v429
          %s431 = vtos %v430
          %v432 = vld [vmem:[%s310] sm:$0xff]
          %433 = vadd.xlane.f32.xlu0 %v432
          %v434 = vpop.xlane.xlu0 %433
          %v435 = vrot.slane %v434, 4
          %v436 = vadd.f32 %v434, %v435
          %v437 = vrot.slane %v436, 2
          %v438 = vadd.f32 %v436, %v437
          %v439 = vrot.slane %v438, 1
          %v440 = vadd.f32 %v438, %v439
          %s441 = vtos %v440
          %s442 = sadd.f32 %s431, %s441
          %s443 = ssub.f32 %s442, %s421
          %s444 = sadd.f32 %s421, 1e-06
          %s445 = sadd.f32 %s443, 1e-06
          %v446 = vstv %s445
          %v447 = vrcp.pop %v446
          %s448 = vtos %v447
          %s449 = smul.f32 %s444, %s448
          %s450 = smul.f32 %s449, 2.0
          %s451 = sadd.f32 %s449, 1.0
          %v452 = vstv %s451
          %v453 = vrcp.pop %v452
          %s454 = vtos %v453
          %s455 = smul.f32 %s450, %s454
          %s456 = sadd.f32 %s411, %s455
          %v457 = vrcp.pop 3.0
          %s458 = vtos %v457
          %s459 = smul.f32 %s456, %s458
          %v460 = vstv %s459
          %vm461 = vcmask 0
          %462 = vst.msk [vmem:[#allocation10] sm:$0x1] %vm461, %v460
        $region44: #{tpu_custom_call.1} parent=27 // pred_fallthru
          _
        // Predicated region
        $region45: #{tpu_custom_call.1} parent=27 // pred_check
          %p463 = pneg %p101
        $region46: #{tpu_custom_call.1} parent=27 // pred_check_branch
          %465 = sbr.rel (%p463) target = $region48
        $region47: #{tpu_custom_call.1} parent=27 // pred_region
          %s467 = ssub.s32 16, 16
          %468 = vsyncadd [#allocation7], %s467
          %s470 = sshll.u32 [#allocation10], 4
          %s471 = int_to_ptr.vmem [resolvable:$true] %s470
          %473 = dma.vmem_to_hbm [thread:$0]  %s471, 16, %s2, [#allocation7]
        $region48: #{tpu_custom_call.1} parent=27 // pred_fallthru
          _
        // Predicated region
        $region49: #{tpu_custom_call.1} parent=27 // pred_check
          %p474 = pneg %p101
        $region50: #{tpu_custom_call.1} parent=27 // pred_check_branch
          %476 = sbr.rel (%p474) target = $region52
        $region51: #{tpu_custom_call.1} parent=27 // pred_region
          %477 = dma.done [#allocation7], 16
        $region52: #{tpu_custom_call.1} parent=27 // pred_fallthru
          _
      $region28: #{tpu_custom_call.1} parent=5 // pred_fallthru
        _
      %p478 = scmp.le.s32.totalorder 2, %s15
      // Predicated region
      $region53: #{tpu_custom_call.1} parent=5 // pred_check
        %p479 = pneg %p478
      $region54: #{tpu_custom_call.1} parent=5 // pred_check_branch
        %481 = sbr.rel (%p479) target = $region56
      $region55: #{tpu_custom_call.1} parent=5 // pred_region
        %s482 = ssub.s32 %s15, 2
      $region56: #{tpu_custom_call.1} parent=5 // pred_fallthru
        _
    $region6: #{tpu_custom_call.1} parent=1 // loop_footer
      %s19 = sadd.s32 1, %s15
    $region7: #{tpu_custom_call.1} parent=1 // loop_footer_branch
      %14 = sbr.rel target = $region3
    $region8: #{tpu_custom_call.1} parent=1 // loop_exit
      _
    %483 = vsyncpa [#allocation6], 1
    %s484 = scalar_lea.sflag [#allocation6], 1
    %485 = vsyncpa %s484, 1
    %486 = vsyncpa [#allocation9], 1
    %s487 = scalar_lea.sflag [#allocation9], 1
    %488 = vsyncpa %s487, 1
    %489 = vsyncpa [#allocation7], 1
    %s490 = scalar_lea.sflag [#allocation7], 1
    %491 = vsyncpa %s490, 1

</llo_original>
